<compile_context>
chip_gen: v5e
topology: v5e:2x2
jax: 0.10.0
libtpu: 0.0.40
codegen_flags: <defaults>
</compile_context>

<pallas_src>
import functools

import jax
import jax.numpy as jnp
from jax import lax
from jax.experimental import pallas as pl
from jax.experimental.pallas import tpu as pltpu

_NEG_INF = -1e30


# ----------------------------------------------------------------------------
# Kernel 1: fused Q|K|V projection + hoisted output-linear "x" term,
#           everything emitted feature-major ([features, nodes], lane-dense).
# ----------------------------------------------------------------------------
def _proj_kernel(x_ref, wqkv_t_ref, bqkv_t_ref, wox_t_ref, bo_t_ref,
                 qkv_ref, base_ref):
    x = x_ref[...]                                              # [t_row, dim]
    # (x @ [wq|wk|wv])^T computed directly in transposed form: a single MXU
    # pass with a lane-dense [3*dim, t_row] result (nodes on lanes).
    qkv_t = lax.dot_general(wqkv_t_ref[...], x, (((1,), (1,)), ((), ())),
                            preferred_element_type=jnp.float32)
    qkv_ref[...] = (qkv_t + bqkv_t_ref[...]).astype(qkv_ref.dtype)
    # Hoisted (x @ wo_x + bo)^T: keeps kernel 2's finalize off the critical
    # path and removes the x / wo_x input streams from kernel 2.
    base_t = lax.dot_general(wox_t_ref[...], x, (((1,), (1,)), ((), ())),
                             preferred_element_type=jnp.float32)
    base_ref[...] = (base_t + bo_t_ref[...]).astype(base_ref.dtype)


# ----------------------------------------------------------------------------
# Kernel 2: flash-style masked graph attention over a (dst-tile, src-tile)
#           grid, fused with the output linear.  Empty src tiles are skipped
#           via scalar-prefetched per-tile edge counts.
# ----------------------------------------------------------------------------
def _attention_kernel(counts_ref, adj_ref, q_ref, k_ref, v_ref, base_ref,
                      wom_t_ref, out_ref, m_sc, l_sc, acc_sc,
                      *, num_heads, head_dim):
    i = pl.program_id(0)          # destination tile ("parallel")
    j = pl.program_id(1)          # source tile (reduction axis, "arbitrary")

    @pl.when(j == 0)
    def _init():
        m_sc[...] = jnp.full_like(m_sc, _NEG_INF)
        l_sc[...] = jnp.zeros_like(l_sc)
        acc_sc[...] = jnp.zeros_like(acc_sc)

    @pl.when(counts_ref[i, j] > 0)      # skip (dst, src) tiles with no edges
    def _compute():
        edge = adj_ref[...].astype(jnp.int32) != 0              # [t_src, t_dst]
        q_all = q_ref[...]                                      # [dim, t_src]
        k_all = k_ref[...]                                      # [dim, t_dst]
        v_all = v_ref[...]                                      # [dim, t_src]
        for h in range(num_heads):
            r = slice(h * head_dim, (h + 1) * head_dim)
            # scores[u, v] = <q[u, h], k[v, h]>   (scale folded into wq / bq)
            s_h = jnp.dot(jnp.transpose(q_all[r, :]), k_all[r, :],
                          preferred_element_type=jnp.float32)   # [t_src, t_dst]
            s_h = jnp.where(edge, s_h, _NEG_INF)
            m_prev = m_sc[h]                                    # [1, t_dst]
            m_new = jnp.maximum(m_prev, jnp.max(s_h, axis=0, keepdims=True))
            alpha = jnp.exp(m_prev - m_new)
            # Explicit edge mask on p: dst nodes with no in-edges end with
            # l == 0 and acc == 0 (robust, no magic-constant validity gate).
            p_h = jnp.where(edge, jnp.exp(s_h - m_new), 0.0)
            l_sc[h] = alpha * l_sc[h] + jnp.sum(p_h, axis=0, keepdims=True)
            # PV: contraction depth = t_src (full MXU depth), lane-dense result.
            acc_sc[h] = alpha * acc_sc[h] + jnp.dot(
                v_all[r, :], p_h, preferred_element_type=jnp.float32)
            m_sc[h] = m_new

    @pl.when(j == pl.num_programs(1) - 1)
    def _finalize():
        dim = num_heads * head_dim
        t_dst = out_ref.shape[1]
        inv_l = pl.reciprocal(jnp.maximum(l_sc[...], 1e-30), approx=True)
        msg = (acc_sc[...] * inv_l).reshape(dim, t_dst)         # [dim, t_dst]
        out_t = base_ref[...] + jnp.dot(wom_t_ref[...], msg,
                                        preferred_element_type=jnp.float32)
        out_ref[...] = out_t.astype(out_ref.dtype)


def transformer_attention_sep(x, adj, params, *, num_heads, tile_nodes=128):
    """Forward pass of TransformerAttentionSepModule (eval mode)."""
    n, dim = x.shape
    assert dim % num_heads == 0, "hidden_dim must be a multiple of num_heads"
    head_dim = dim // num_heads
    scale = 1.0 / float(head_dim) ** 0.5
    t = tile_nodes            # sweep 256-512 on v6e (128 MiB VMEM); 128 is safe on all chips

    # Pad node count to a tile multiple (padded nodes have zero features and no
    # edges; their outputs are sliced off).  Keeps blocks O(tile^2), grids real.
    n_pad = ((n + t - 1) // t) * t
    if n_pad != n:
        x_p = jnp.zeros((n_pad, dim), x.dtype).at[:n, :].set(x)
        adj_p = jnp.zeros((n_pad, n_pad), adj.dtype).at[:n, :n].set(adj)
    else:
        x_p, adj_p = x, adj

    # Adjacency streamed as int8 (mask built in-kernel); per-tile edge counts
    # for scalar-prefetch tile skipping.
    adj_i8 = (adj_p != 0).astype(jnp.int8)                        # [src, dst]
    n_tiles = n_pad // t
    counts = adj_i8.astype(jnp.int32).reshape(n_tiles, t, n_tiles, t)
    counts = counts.sum(axis=(1, 3)).T.astype(jnp.int32)          # [dst_t, src_t]

    # Wrapper-side layout plumbing:
    #  * 1/sqrt(head_dim) folded into wq / bq,
    #  * q|k|v weights fused into one [3*dim, dim] transposed weight,
    #  * all weights stored [out_features, in_features] so the kernels emit
    #    feature-major (nodes-on-lanes) tensors with lane-dense stores.
    wqkv_t = jnp.concatenate([params["wq"] * scale, params["wk"], params["wv"]],
                             axis=1).T                             # [3*dim, dim]
    bqkv_t = jnp.concatenate([params["bq"] * scale, params["bk"], params["bv"]],
                             axis=1).T                             # [3*dim, 1]
    wox_t = params["wo_x"].T                                       # [dim, dim]
    bo_t = params["bo"].T                                          # [dim, 1]
    wom_t = params["wo_m"].T                                       # [dim, dim]

    # ---- kernel 1: fused QKV + output-linear x-term --------------------
    qkv, base_t = pl.pallas_call(
        _proj_kernel,
        grid=(n_pad // t,),
        in_specs=[pl.BlockSpec((t, dim), lambda i: (i, 0)),
                  pl.BlockSpec((3 * dim, dim), lambda i: (0, 0)),
                  pl.BlockSpec((3 * dim, 1), lambda i: (0, 0)),
                  pl.BlockSpec((dim, dim), lambda i: (0, 0)),
                  pl.BlockSpec((dim, 1), lambda i: (0, 0))],
        out_specs=[pl.BlockSpec((3 * dim, t), lambda i: (0, i)),
                   pl.BlockSpec((dim, t), lambda i: (0, i))],
        out_shape=(jax.ShapeDtypeStruct((3 * dim, n_pad), jnp.float32),
                   jax.ShapeDtypeStruct((dim, n_pad), jnp.float32)),
        compiler_params=pltpu.CompilerParams(
            dimension_semantics=("parallel",),
            vmem_limit_bytes=32 * 1024 * 1024),
    )(x_p, wqkv_t, bqkv_t, wox_t, bo_t)

    # ---- kernel 2: flash-style attention + fused output linear ---------
    attn_kernel = functools.partial(_attention_kernel, num_heads=num_heads,
                                    head_dim=head_dim)
    grid_spec = pltpu.PrefetchScalarGridSpec(
        num_scalar_prefetch=1,
        grid=(n_tiles, n_tiles),
        in_specs=[
            pl.BlockSpec((t, t), lambda i, j, c: (j, i)),        # adj[src, dst] int8
            pl.BlockSpec((dim, t), lambda i, j, c: (0, j)),      # q rows of qkv (src)
            pl.BlockSpec((dim, t), lambda i, j, c: (1, i)),      # k rows of qkv (dst)
            pl.BlockSpec((dim, t), lambda i, j, c: (2, j)),      # v rows of qkv (src)
            pl.BlockSpec((dim, t), lambda i, j, c: (0, i)),      # base (dst)
            pl.BlockSpec((dim, dim), lambda i, j, c: (0, 0)),    # wo_m^T
        ],
        out_specs=pl.BlockSpec((dim, t), lambda i, j, c: (0, i)),
        scratch_shapes=[
            pltpu.VMEM((num_heads, 1, t), jnp.float32),          # running max
            pltpu.VMEM((num_heads, 1, t), jnp.float32),          # running denom
            pltpu.VMEM((num_heads, head_dim, t), jnp.float32),   # unnormalized msg^T
        ],
    )
    out_t = pl.pallas_call(
        attn_kernel,
        grid_spec=grid_spec,
        out_shape=jax.ShapeDtypeStruct((dim, n_pad), jnp.float32),
        compiler_params=pltpu.CompilerParams(
            dimension_semantics=("parallel", "arbitrary"),
            vmem_limit_bytes=32 * 1024 * 1024),
    )(counts, adj_i8, qkv, qkv, qkv, base_t, wom_t)

    # TODO(synk): nn.Dropout is applied as identity (eval mode); stochastic
    # training-mode dropout is not implemented.
    return out_t.T[:n, :]


def _reference(x, adj, params, *, num_heads):
    """Pure-JAX reference of the PyTorch forward pass (eval mode)."""
    n, dim = x.shape
    hd = dim // num_heads
    q = (x @ params["wq"] + params["bq"]).reshape(n, num_heads, hd)
    k = (x @ params["wk"] + params["bk"]).reshape(n, num_heads, hd)
    v = (x @ params["wv"] + params["bv"]).reshape(n, num_heads, hd)
    # scores[v, u, h] = <q[u, h], k[v, h]> / sqrt(hd) for edge u->v
    s = jnp.einsum("uhd,vhd->vuh", q, k) / (hd ** 0.5)
    mask = (adj.T > 0.0)[:, :, None]
    s = jnp.where(mask, s, -1e30)
    m = jnp.max(s, axis=1, keepdims=True)
    e = jnp.where(mask, jnp.exp(s - m), 0.0)
    p = e / jnp.maximum(jnp.sum(e, axis=1, keepdims=True), 1e-30)
    msg = jnp.einsum("vuh,uhd->vhd", p, v).reshape(n, dim)
    cat = jnp.concatenate([x, msg], axis=1)
    wo = jnp.concatenate([params["wo_x"], params["wo_m"]], axis=0)
    return cat @ wo + params["bo"]


if __name__ == "__main__":
    N = 256         # number of graph nodes (2x2 dst/src tile grid)
    DIM = 32        # hidden dim
    NUM_HEADS = 4   # -> head_dim = 8

    key = jax.random.PRNGKey(0)
    kx, kadj, kq, kk, kv, ko, kbq, kbk, kbv, kbo = jax.random.split(key, 10)

    # Node features.
    x = jax.random.normal(kx, (N, DIM), dtype=jnp.float32)

    # Random sparse adjacency (edge u->v) with self-loops, then strip all
    # incoming edges from the first few nodes to exercise the no-in-edge path.
    adj = (jax.random.uniform(kadj, (N, N)) < 0.1).astype(jnp.float32)
    adj = jnp.maximum(adj, jnp.eye(N, dtype=jnp.float32))
    adj = adj.at[:, :4].set(0.0)

    # Deterministic parameter init (shapes mirror the PyTorch module, stored
    # as [in, out]; output_linear weight [2*dim, dim] pre-split row-wise).
    s = 0.1
    params = {
        "wq": s * jax.random.normal(kq, (DIM, DIM), dtype=jnp.float32),
        "wk": s * jax.random.normal(kk, (DIM, DIM), dtype=jnp.float32),
        "wv": s * jax.random.normal(kv, (DIM, DIM), dtype=jnp.float32),
        "bq": s * jax.random.normal(kbq, (1, DIM), dtype=jnp.float32),
        "bk": s * jax.random.normal(kbk, (1, DIM), dtype=jnp.float32),
        "bv": s * jax.random.normal(kbv, (1, DIM), dtype=jnp.float32),
        "bo": s * jax.random.normal(kbo, (1, DIM), dtype=jnp.float32),
    }
    wo_full = s * jax.random.normal(ko, (2 * DIM, DIM), dtype=jnp.float32)
    params["wo_x"] = wo_full[:DIM]
    params["wo_m"] = wo_full[DIM:]

    out = transformer_attention_sep(x, adj, params, num_heads=NUM_HEADS)
    out = jax.block_until_ready(out)

    ref = _reference(x, adj, params, num_heads=NUM_HEADS)
    assert out.shape == (N, DIM)
    assert bool(jnp.all(jnp.isfinite(out)))
    err = float(jnp.max(jnp.abs(out - ref)))
    assert bool(jnp.allclose(out, ref, rtol=5e-3, atol=5e-3)), f"max abs err = {err}"

    print("KERNEL_OK")
</pallas_src>

<mosaic_0001>
module attributes {stable_mosaic.version = 11 : i64} {
  func.func @_proj_kernel(%arg0: i32, %arg1: memref<128x32xf32, #tpu.memory_space<vmem>>, %arg2: memref<96x32xf32, #tpu.memory_space<vmem>>, %arg3: memref<96x1xf32, #tpu.memory_space<vmem>>, %arg4: memref<32x32xf32, #tpu.memory_space<vmem>>, %arg5: memref<32x1xf32, #tpu.memory_space<vmem>>, %arg6: memref<96x128xf32, #tpu.memory_space<vmem>>, %arg7: memref<32x128xf32, #tpu.memory_space<vmem>>) attributes {dimension_semantics = [#tpu.dimension_semantics<parallel>], iteration_bounds = array<i64: 2>, scalar_prefetch = 0 : i64, scratch_operands = 0 : i64, tpu.core_type = #tpu.core_type<tc>, window_params = [{transform_indices = @transform_0, window_bounds = array<i64: 128, 32>}, {pipeline_mode = #tpu.pipeline_mode<synchronous>, transform_indices = @transform_1, window_bounds = array<i64: 96, 32>}, {pipeline_mode = #tpu.pipeline_mode<synchronous>, transform_indices = @transform_2, window_bounds = array<i64: 96, 1>}, {pipeline_mode = #tpu.pipeline_mode<synchronous>, transform_indices = @transform_3, window_bounds = array<i64: 32, 32>}, {pipeline_mode = #tpu.pipeline_mode<synchronous>, transform_indices = @transform_4, window_bounds = array<i64: 32, 1>}, {transform_indices = @transform_5, window_bounds = array<i64: 96, 128>}, {transform_indices = @transform_6, window_bounds = array<i64: 32, 128>}]} {
    %c0 = arith.constant 0 : index
    %c0_0 = arith.constant 0 : index
    %0 = vector.load %arg1[%c0, %c0_0] : memref<128x32xf32, #tpu.memory_space<vmem>>, vector<128x32xf32>
    %c0_1 = arith.constant 0 : index
    %c0_2 = arith.constant 0 : index
    %1 = vector.load %arg2[%c0_1, %c0_2] : memref<96x32xf32, #tpu.memory_space<vmem>>, vector<96x32xf32>
    %cst = arith.constant dense<0.000000e+00> : vector<96x128xf32>
    %2 = tpu.matmul %1, %0, %cst {dimension_numbers = #tpu.dot_dimension_numbers<[1], [1], [0], [0], [0, 0, 1, 0], [], []>} : vector<96x32xf32>, vector<128x32xf32>, vector<96x128xf32> -> vector<96x128xf32>
    %c0_3 = arith.constant 0 : index
    %c0_4 = arith.constant 0 : index
    %3 = vector.load %arg3[%c0_3, %c0_4] : memref<96x1xf32, #tpu.memory_space<vmem>>, vector<96x1xf32>
    %4 = vector.broadcast %3 : vector<96x1xf32> to vector<96x128xf32>
    %5 = arith.addf %2, %4 : vector<96x128xf32>
    %c0_5 = arith.constant 0 : index
    %c0_6 = arith.constant 0 : index
    %6 = vector.load %arg6[%c0_5, %c0_6] : memref<96x128xf32, #tpu.memory_space<vmem>>, vector<96x128xf32>
    tpu.vector_store %arg6[%c0_5, %c0_6], %5 {strides = array<i32>} : memref<96x128xf32, #tpu.memory_space<vmem>>, vector<96x128xf32>,
    %c0_7 = arith.constant 0 : index
    %c0_8 = arith.constant 0 : index
    %7 = vector.load %arg4[%c0_7, %c0_8] : memref<32x32xf32, #tpu.memory_space<vmem>>, vector<32x32xf32>
    %cst_9 = arith.constant dense<0.000000e+00> : vector<32x128xf32>
    %8 = tpu.matmul %7, %0, %cst_9 {dimension_numbers = #tpu.dot_dimension_numbers<[1], [1], [0], [0], [0, 0, 1, 0], [], []>} : vector<32x32xf32>, vector<128x32xf32>, vector<32x128xf32> -> vector<32x128xf32>
    %c0_10 = arith.constant 0 : index
    %c0_11 = arith.constant 0 : index
    %9 = vector.load %arg5[%c0_10, %c0_11] : memref<32x1xf32, #tpu.memory_space<vmem>>, vector<32x1xf32>
    %10 = vector.broadcast %9 : vector<32x1xf32> to vector<32x128xf32>
    %11 = arith.addf %8, %10 : vector<32x128xf32>
    %c0_12 = arith.constant 0 : index
    %c0_13 = arith.constant 0 : index
    %12 = vector.load %arg7[%c0_12, %c0_13] : memref<32x128xf32, #tpu.memory_space<vmem>>, vector<32x128xf32>
    tpu.vector_store %arg7[%c0_12, %c0_13], %11 {strides = array<i32>} : memref<32x128xf32, #tpu.memory_space<vmem>>, vector<32x128xf32>,
    return
  }
  func.func @transform_0(%arg0: i32) -> (i32, i32) {
    %c0_i32 = arith.constant 0 : i32
    %c0_i32_0 = arith.constant 0 : i32
    return %arg0, %c0_i32 : i32, i32
  }
  func.func @transform_1(%arg0: i32) -> (i32, i32) {
    %c0_i32 = arith.constant 0 : i32
    %c0_i32_0 = arith.constant 0 : i32
    %c0_i32_1 = arith.constant 0 : i32
    return %c0_i32, %c0_i32_0 : i32, i32
  }
  func.func @transform_2(%arg0: i32) -> (i32, i32) {
    %c0_i32 = arith.constant 0 : i32
    %c0_i32_0 = arith.constant 0 : i32
    %c0_i32_1 = arith.constant 0 : i32
    return %c0_i32, %c0_i32_0 : i32, i32
  }
  func.func @transform_3(%arg0: i32) -> (i32, i32) {
    %c0_i32 = arith.constant 0 : i32
    %c0_i32_0 = arith.constant 0 : i32
    %c0_i32_1 = arith.constant 0 : i32
    return %c0_i32, %c0_i32_0 : i32, i32
  }
  func.func @transform_4(%arg0: i32) -> (i32, i32) {
    %c0_i32 = arith.constant 0 : i32
    %c0_i32_0 = arith.constant 0 : i32
    %c0_i32_1 = arith.constant 0 : i32
    return %c0_i32, %c0_i32_0 : i32, i32
  }
  func.func @transform_5(%arg0: i32) -> (i32, i32) {
    %c0_i32 = arith.constant 0 : i32
    %c0_i32_0 = arith.constant 0 : i32
    return %c0_i32, %arg0 : i32, i32
  }
  func.func @transform_6(%arg0: i32) -> (i32, i32) {
    %c0_i32 = arith.constant 0 : i32
    %c0_i32_0 = arith.constant 0 : i32
    return %c0_i32, %arg0 : i32, i32
  }
}

</mosaic_0001>

<llo_original>
// kernel: tpu_custom_call.1
$region0: #{tpu_custom_call.1}
  #allocation0 [shape = 'u32[]', space=smem, size = 0x4, offset = 0x4, fixed_abs, tag = 'smem constant byte address 0x4 - core index']
  #allocation1 [shape = 'u32[72,128]{1,0:T(1,128)}', space=vmem, size = 0x9000, scoped, tag = 'internal scratch']
  %s0 = inlined_call_operand.vmem [shape: f32[256,32], index: 0, kind: input, shape index: {}]
  %s1 = inlined_call_operand.vmem [shape: f32[96,32], index: 1, kind: input, shape index: {}]
  %s2 = inlined_call_operand.vmem [shape: f32[96,1], index: 2, kind: input, shape index: {}]
  %s3 = inlined_call_operand.vmem [shape: f32[32,32], index: 3, kind: input, shape index: {}]
  %s4 = inlined_call_operand.vmem [shape: f32[32,1], index: 4, kind: input, shape index: {}]
  %s5 = inlined_call_operand.hbm [shape: f32[96,256], index: 5, kind: output, shape index: {0}]
  %s6 = inlined_call_operand.hbm [shape: f32[32,256], index: 6, kind: output, shape index: {1}]
  %7 = xla_tuple %s5, %s6
  %s8 = sld [smem:[#allocation0]]
  $region61: #{tpu_custom_call.1} parent=0
    _
  %s10 = ssub.s32 1, %s8
  %s11 = scalar_select 0, %s10, %s8
  $region1: #{tpu_custom_call.1} parent=0
    #allocation2 [shape = 'u8[98304]{0}', space=vmem, size = 0x18000, scoped, tag = 'output window, operand 0']
    #allocation3 [shape = 's32[2]{0}', space=sflag, size = 0x8, scoped, tag = 'scoped memory for tpu_custom_call.1']
    #allocation4 [shape = 'u8[32768]{0}', space=vmem, size = 0x8000, scoped, tag = 'output window, operand 1']
    #allocation5 [shape = 's32[2]{0}', space=sflag, size = 0x8, scoped, tag = 'scoped memory for tpu_custom_call.1']
    %12 = vsyncpa [#allocation3], 0
    %s13 = scalar_lea.sflag [#allocation3], 1
    %14 = vsyncpa %s13, 0
    %15 = vsyncpa [#allocation5], 0
    %s16 = scalar_lea.sflag [#allocation5], 1
    %17 = vsyncpa %s16, 0
    loop: start=0, step=1, limit=4
    $region2: #{tpu_custom_call.1} parent=1 // loop_pre_header
      _
    $region3: #{tpu_custom_call.1} parent=1 // loop_header
      %s19 = sphi 0, %s23
      %p20 = scmp.ge.s32.totalorder %s19, 4
      %s29 = sphi 0, %s31
      %s32 = sphi 0, %s29
      %s33 = sphi 0, %s32
      %s49 = sphi 0, %s33
      %s53 = sphi 0, %s53
      %s55 = sphi 0, %s53
      %s56 = sphi 0, %s55
      %s70 = sphi 0, %s56
      %s74 = sphi 0, %s74
      %s76 = sphi 0, %s74
      %s77 = sphi 0, %s76
      %s91 = sphi 0, %s77
      %s95 = sphi 0, %s95
      %s97 = sphi 0, %s95
      %s98 = sphi 0, %s97
      %s112 = sphi 0, %s98
      %s116 = sphi 0, %s116
      %s118 = sphi 0, %s116
      %s119 = sphi 0, %s118
      %s133 = sphi 0, %s119
      %s139 = sphi 0, %s141
      %s142 = sphi 0, %s139
      %s143 = sphi 0, %s142
      %s159 = sphi 0, %s143
      %s165 = sphi 0, %s167
      %s168 = sphi 0, %s165
      %s169 = sphi 0, %s168
      %s185 = sphi 0, %s169
    $region4: #{tpu_custom_call.1} parent=1 // loop_header_branch
      %22 = sbr.rel (%p20) target = $region8
    $region5: #{tpu_custom_call.1} parent=1 // loop_body
      %s24 = ssub.s32 %s19, 1
      %s25 = ssub.s32 %s19, 2
      %s26 = sadd.s32 %s19, 1
      %s27 = ssub.s32 %s19, %s26
      %p28 = scmp.eq.s32.totalorder %s27, 0
      %s30 = sadd.s32 %s29, 1
      %s31 = scalar_select %p28, %s29, %s30
      %p34 = pneg %p28
      %p35 = scmp.eq.s32.totalorder %s19, 1
      %p36 = por %p34, %p35
      %p37 = scmp.ne.s32.totalorder %s29, %s32
      %p38 = scmp.eq.s32.totalorder %s19, 0
      %p39 = por %p37, %p38
      %p40 = scmp.ne.s32.totalorder %s29, %s32
      %p41 = scmp.eq.s32.totalorder %s24, 1
      %p42 = por %p40, %p41
      %p43 = scmp.ne.s32.totalorder %s32, %s33
      %p44 = scmp.eq.s32.totalorder %s24, 0
      %p45 = por %p43, %p44
      %p46 = scmp.ne.s32.totalorder %s32, %s33
      %p47 = scmp.eq.s32.totalorder %s25, 1
      %p48 = por %p46, %p47
      %p50 = scmp.ne.s32.totalorder %s33, %s49
      %p51 = scmp.eq.s32.totalorder %s25, 0
      %p52 = por %p50, %p51
      %s54 = sadd.s32 %s53, 1
      %p57 = scmp.eq.s32.totalorder %s19, 1
      %p58 = scmp.ne.s32.totalorder %s53, %s55
      %p59 = scmp.eq.s32.totalorder %s19, 0
      %p60 = por %p58, %p59
      %p61 = scmp.ne.s32.totalorder %s53, %s55
      %p62 = scmp.eq.s32.totalorder %s24, 1
      %p63 = por %p61, %p62
      %p64 = scmp.ne.s32.totalorder %s55, %s56
      %p65 = scmp.eq.s32.totalorder %s24, 0
      %p66 = por %p64, %p65
      %p67 = scmp.ne.s32.totalorder %s55, %s56
      %p68 = scmp.eq.s32.totalorder %s25, 1
      %p69 = por %p67, %p68
      %p71 = scmp.ne.s32.totalorder %s56, %s70
      %p72 = scmp.eq.s32.totalorder %s25, 0
      %p73 = por %p71, %p72
      %s75 = sadd.s32 %s74, 1
      %p78 = scmp.eq.s32.totalorder %s19, 1
      %p79 = scmp.ne.s32.totalorder %s74, %s76
      %p80 = scmp.eq.s32.totalorder %s19, 0
      %p81 = por %p79, %p80
      %p82 = scmp.ne.s32.totalorder %s74, %s76
      %p83 = scmp.eq.s32.totalorder %s24, 1
      %p84 = por %p82, %p83
      %p85 = scmp.ne.s32.totalorder %s76, %s77
      %p86 = scmp.eq.s32.totalorder %s24, 0
      %p87 = por %p85, %p86
      %p88 = scmp.ne.s32.totalorder %s76, %s77
      %p89 = scmp.eq.s32.totalorder %s25, 1
      %p90 = por %p88, %p89
      %p92 = scmp.ne.s32.totalorder %s77, %s91
      %p93 = scmp.eq.s32.totalorder %s25, 0
      %p94 = por %p92, %p93
      %s96 = sadd.s32 %s95, 1
      %p99 = scmp.eq.s32.totalorder %s19, 1
      %p100 = scmp.ne.s32.totalorder %s95, %s97
      %p101 = scmp.eq.s32.totalorder %s19, 0
      %p102 = por %p100, %p101
      %p103 = scmp.ne.s32.totalorder %s95, %s97
      %p104 = scmp.eq.s32.totalorder %s24, 1
      %p105 = por %p103, %p104
      %p106 = scmp.ne.s32.totalorder %s97, %s98
      %p107 = scmp.eq.s32.totalorder %s24, 0
      %p108 = por %p106, %p107
      %p109 = scmp.ne.s32.totalorder %s97, %s98
      %p110 = scmp.eq.s32.totalorder %s25, 1
      %p111 = por %p109, %p110
      %p113 = scmp.ne.s32.totalorder %s98, %s112
      %p114 = scmp.eq.s32.totalorder %s25, 0
      %p115 = por %p113, %p114
      %s117 = sadd.s32 %s116, 1
      %p120 = scmp.eq.s32.totalorder %s19, 1
      %p121 = scmp.ne.s32.totalorder %s116, %s118
      %p122 = scmp.eq.s32.totalorder %s19, 0
      %p123 = por %p121, %p122
      %p124 = scmp.ne.s32.totalorder %s116, %s118
      %p125 = scmp.eq.s32.totalorder %s24, 1
      %p126 = por %p124, %p125
      %p127 = scmp.ne.s32.totalorder %s118, %s119
      %p128 = scmp.eq.s32.totalorder %s24, 0
      %p129 = por %p127, %p128
      %p130 = scmp.ne.s32.totalorder %s118, %s119
      %p131 = scmp.eq.s32.totalorder %s25, 1
      %p132 = por %p130, %p131
      %p134 = scmp.ne.s32.totalorder %s119, %s133
      %p135 = scmp.eq.s32.totalorder %s25, 0
      %p136 = por %p134, %p135
      %s137 = ssub.s32 %s19, %s26
      %p138 = scmp.eq.s32.totalorder %s137, 0
      %s140 = sadd.s32 %s139, 1
      %s141 = scalar_select %p138, %s139, %s140
      %p144 = pneg %p138
      %p145 = scmp.eq.s32.totalorder %s19, 1
      %p146 = por %p144, %p145
      %p147 = scmp.ne.s32.totalorder %s139, %s142
      %p148 = scmp.eq.s32.totalorder %s19, 0
      %p149 = por %p147, %p148
      %p150 = scmp.ne.s32.totalorder %s139, %s142
      %p151 = scmp.eq.s32.totalorder %s24, 1
      %p152 = por %p150, %p151
      %p153 = scmp.ne.s32.totalorder %s142, %s143
      %p154 = scmp.eq.s32.totalorder %s24, 0
      %p155 = por %p153, %p154
      %p156 = scmp.ne.s32.totalorder %s142, %s143
      %p157 = scmp.eq.s32.totalorder %s25, 1
      %p158 = por %p156, %p157
      %p160 = scmp.ne.s32.totalorder %s143, %s159
      %p161 = scmp.eq.s32.totalorder %s25, 0
      %p162 = por %p160, %p161
      %s163 = ssub.s32 %s19, %s26
      %p164 = scmp.eq.s32.totalorder %s163, 0
      %s166 = sadd.s32 %s165, 1
      %s167 = scalar_select %p164, %s165, %s166
      %p170 = pneg %p164
      %p171 = scmp.eq.s32.totalorder %s19, 1
      %p172 = por %p170, %p171
      %p173 = scmp.ne.s32.totalorder %s165, %s168
      %p174 = scmp.eq.s32.totalorder %s19, 0
      %p175 = por %p173, %p174
      %p176 = scmp.ne.s32.totalorder %s165, %s168
      %p177 = scmp.eq.s32.totalorder %s24, 1
      %p178 = por %p176, %p177
      %p179 = scmp.ne.s32.totalorder %s168, %s169
      %p180 = scmp.eq.s32.totalorder %s24, 0
      %p181 = por %p179, %p180
      %p182 = scmp.ne.s32.totalorder %s168, %s169
      %p183 = scmp.eq.s32.totalorder %s25, 1
      %p184 = por %p182, %p183
      %p186 = scmp.ne.s32.totalorder %s169, %s185
      %p187 = scmp.eq.s32.totalorder %s25, 0
      %p188 = por %p186, %p187
      %p189 = scmp.le.s32.totalorder 1, %s19
      %p190 = scmp.lt.s32.totalorder %s19, 3
      %p191 = pnand %p189, %p190
      %p192 = pneg %p191
      // Predicated region
      $region9: #{tpu_custom_call.1} parent=5 // pred_check
        _
      $region10: #{tpu_custom_call.1} parent=5 // pred_check_branch
        %194 = sbr.rel (%p191) target = $region12
      $region11: #{tpu_custom_call.1} parent=5 // pred_region
        %s195 = ssub.s32 %s19, 1
        // Predicated region
        $region13: #{tpu_custom_call.1} parent=11 // pred_check
          %p196 = pneg %p66
        $region14: #{tpu_custom_call.1} parent=11 // pred_check_branch
          %198 = sbr.rel (%p196) target = $region16
        $region15: #{tpu_custom_call.1} parent=11 // pred_region
          _
        $region16: #{tpu_custom_call.1} parent=11 // pred_fallthru
          _
        // Predicated region
        $region17: #{tpu_custom_call.1} parent=11 // pred_check
          %p199 = pneg %p87
        $region18: #{tpu_custom_call.1} parent=11 // pred_check_branch
          %201 = sbr.rel (%p199) target = $region20
        $region19: #{tpu_custom_call.1} parent=11 // pred_region
          _
        $region20: #{tpu_custom_call.1} parent=11 // pred_fallthru
          _
        // Predicated region
        $region21: #{tpu_custom_call.1} parent=11 // pred_check
          %p202 = pneg %p108
        $region22: #{tpu_custom_call.1} parent=11 // pred_check_branch
          %204 = sbr.rel (%p202) target = $region24
        $region23: #{tpu_custom_call.1} parent=11 // pred_region
          _
        $region24: #{tpu_custom_call.1} parent=11 // pred_fallthru
          _
        // Predicated region
        $region25: #{tpu_custom_call.1} parent=11 // pred_check
          %p205 = pneg %p129
        $region26: #{tpu_custom_call.1} parent=11 // pred_check_branch
          %207 = sbr.rel (%p205) target = $region28
        $region27: #{tpu_custom_call.1} parent=11 // pred_region
          _
        $region28: #{tpu_custom_call.1} parent=11 // pred_fallthru
          _
      $region12: #{tpu_custom_call.1} parent=5 // pred_fallthru
        _
      %p208 = scmp.lt.s32.totalorder %s19, 2
      // Predicated region
      $region29: #{tpu_custom_call.1} parent=5 // pred_check
        %p209 = pneg %p208
      $region30: #{tpu_custom_call.1} parent=5 // pred_check_branch
        %211 = sbr.rel (%p209) target = $region32
      $region31: #{tpu_custom_call.1} parent=5 // pred_region
        // Predicated region
        $region33: #{tpu_custom_call.1} parent=31 // pred_check
          %p212 = pneg %p39
        $region34: #{tpu_custom_call.1} parent=31 // pred_check_branch
          %214 = sbr.rel (%p212) target = $region36
        $region35: #{tpu_custom_call.1} parent=31 // pred_region
          %s215 = smul.u32 16, %s19
          %p216 = scmp.lt.s32.totalorder %s215, 31
          %s217 = scalar_select %p216, %s215, 31
          %s218 = smul.addr %s217, 8
          %s219 = scalar_lea.vmem %s0, %s218
          %s220 = smul.u32 16, %s19
        $region36: #{tpu_custom_call.1} parent=31 // pred_fallthru
          _
      $region32: #{tpu_custom_call.1} parent=5 // pred_fallthru
        _
      %p221 = scmp.le.s32.totalorder 1, %s19
      %p222 = scmp.lt.s32.totalorder %s19, 3
      %p223 = pnand %p221, %p222
      %p224 = pneg %p223
      // Predicated region
      $region37: #{tpu_custom_call.1} parent=5 // pred_check
        _
      $region38: #{tpu_custom_call.1} parent=5 // pred_check_branch
        %226 = sbr.rel (%p223) target = $region40
      $region39: #{tpu_custom_call.1} parent=5 // pred_region
        %s227 = ssub.s32 %s19, 1
        %s228 = smul.u32 16, %s24
        %p229 = scmp.lt.s32.totalorder %s228, 31
        %s230 = scalar_select %p229, %s228, 31
        %s231 = smul.addr %s230, 8
        %s232 = scalar_lea.vmem %s0, %s231
        %p233 = pneg %p45
        %p234 = pneg %p42
        %p235 = pneg %p66
        %p236 = pneg %p63
        %p237 = pneg %p87
        %p238 = pneg %p84
        %p239 = pneg %p108
        %p240 = pneg %p105
        %p241 = pneg %p129
        %p242 = pneg %p126
        %p243 = pneg %p155
        %p244 = pneg %p152
        %s245 = sand.u32 %s142, 1
        %s246 = scalar_lea.sflag [#allocation3], %s245
        %s247 = sand.u32 %s142, 1
        %s248 = smul.addr %s247, 96
        %s249 = scalar_lea.vmem [#allocation2], %s248
        %p250 = pneg %p181
        %p251 = pneg %p178
        %s252 = sand.u32 %s168, 1
        %s253 = scalar_lea.sflag [#allocation5], %s252
        %s254 = sand.u32 %s168, 1
        %s255 = smul.addr %s254, 32
        %s256 = scalar_lea.vmem [#allocation4], %s255
        %s257 = smul.u32 16, %s24
        %p258 = scmp.lt.s32.totalorder %s257, 31
        %s259 = scalar_select %p258, %s257, 31
        %s260 = smul.addr %s259, 8
        %s261 = scalar_lea.vmem %s0, %s260
        %s262 = smul.u32 16, %s24
        %v263 = vld [vmem:[%s261] sm:$0xff]
        %v264 = vld [vmem:[%s261 + $0x8] sm:$0xff]
        %v265 = vld [vmem:[%s261 + $0x10] sm:$0xff]
        %v266 = vld [vmem:[%s261 + $0x18] sm:$0xff]
        %v267 = vld [vmem:[%s261 + $0x20] sm:$0xff]
        %v268 = vld [vmem:[%s261 + $0x28] sm:$0xff]
        %v269 = vld [vmem:[%s261 + $0x30] sm:$0xff]
        %v270 = vld [vmem:[%s261 + $0x38] sm:$0xff]
        %v271 = vld [vmem:[%s261 + $0x40] sm:$0xff]
        %v272 = vld [vmem:[%s261 + $0x48] sm:$0xff]
        %v273 = vld [vmem:[%s261 + $0x50] sm:$0xff]
        %v274 = vld [vmem:[%s261 + $0x58] sm:$0xff]
        %v275 = vld [vmem:[%s261 + $0x60] sm:$0xff]
        %v276 = vld [vmem:[%s261 + $0x68] sm:$0xff]
        %v277 = vld [vmem:[%s261 + $0x70] sm:$0xff]
        %v278 = vld [vmem:[%s261 + $0x78] sm:$0xff]
        %v279 = vld [vmem:[%s1] sm:$0xff]
        %v280 = vld [vmem:[%s1 + $0x8] sm:$0xff]
        %v281 = vld [vmem:[%s1 + $0x10] sm:$0xff]
        %v282 = vld [vmem:[%s1 + $0x18] sm:$0xff]
        %v283 = vld [vmem:[%s1 + $0x20] sm:$0xff]
        %v284 = vld [vmem:[%s1 + $0x28] sm:$0xff]
        %v285 = vld [vmem:[%s1 + $0x30] sm:$0xff]
        %v286 = vld [vmem:[%s1 + $0x38] sm:$0xff]
        %v287 = vld [vmem:[%s1 + $0x40] sm:$0xff]
        %v288 = vld [vmem:[%s1 + $0x48] sm:$0xff]
        %v289 = vld [vmem:[%s1 + $0x50] sm:$0xff]
        %v290 = vld [vmem:[%s1 + $0x58] sm:$0xff]
        %v291 = vld [vmem:[%s2] sm:$0xff]
        %v292 = vld [vmem:[%s2 + $0x8] sm:$0xff]
        %v293 = vld [vmem:[%s2 + $0x10] sm:$0xff]
        %v294 = vld [vmem:[%s2 + $0x18] sm:$0xff]
        %v295 = vld [vmem:[%s2 + $0x20] sm:$0xff]
        %v296 = vld [vmem:[%s2 + $0x28] sm:$0xff]
        %v297 = vld [vmem:[%s2 + $0x30] sm:$0xff]
        %v298 = vld [vmem:[%s2 + $0x38] sm:$0xff]
        %v299 = vld [vmem:[%s2 + $0x40] sm:$0xff]
        %v300 = vld [vmem:[%s2 + $0x48] sm:$0xff]
        %v301 = vld [vmem:[%s2 + $0x50] sm:$0xff]
        %v302 = vld [vmem:[%s2 + $0x58] sm:$0xff]
        %304 = vset.pattern.permute.xlu0 0
        %305 = vperm.xlu0 %304, %v291
        %v306 = vpop.permute.xlu0 %305
        %309 = vset.pattern.permute.xlu0 0
        %310 = vperm.xlu0 %309, %v292
        %v311 = vpop.permute.xlu0 %310
        %314 = vset.pattern.permute.xlu0 0
        %315 = vperm.xlu0 %314, %v293
        %v316 = vpop.permute.xlu0 %315
        %319 = vset.pattern.permute.xlu0 0
        %320 = vperm.xlu0 %319, %v294
        %v321 = vpop.permute.xlu0 %320
        %324 = vset.pattern.permute.xlu0 0
        %325 = vperm.xlu0 %324, %v295
        %v326 = vpop.permute.xlu0 %325
        %329 = vset.pattern.permute.xlu0 0
        %330 = vperm.xlu0 %329, %v296
        %v331 = vpop.permute.xlu0 %330
        %334 = vset.pattern.permute.xlu0 0
        %335 = vperm.xlu0 %334, %v297
        %v336 = vpop.permute.xlu0 %335
        %339 = vset.pattern.permute.xlu0 0
        %340 = vperm.xlu0 %339, %v298
        %v341 = vpop.permute.xlu0 %340
        %344 = vset.pattern.permute.xlu0 0
        %345 = vperm.xlu0 %344, %v299
        %v346 = vpop.permute.xlu0 %345
        %349 = vset.pattern.permute.xlu0 0
        %350 = vperm.xlu0 %349, %v300
        %v351 = vpop.permute.xlu0 %350
        %354 = vset.pattern.permute.xlu0 0
        %355 = vperm.xlu0 %354, %v301
        %v356 = vpop.permute.xlu0 %355
        %359 = vset.pattern.permute.xlu0 0
        %360 = vperm.xlu0 %359, %v302
        %v361 = vpop.permute.xlu0 %360
        %vm363 = vcmask 261120
        %v365 = vsel %vm363, %v279, 0
        %v368 = vsel %vm363, %v280, 0
        %v371 = vsel %vm363, %v281, 0
        %v374 = vsel %vm363, %v282, 0
        %v377 = vsel %vm363, %v283, 0
        %v380 = vsel %vm363, %v284, 0
        %v383 = vsel %vm363, %v285, 0
        %v386 = vsel %vm363, %v286, 0
        %v389 = vsel %vm363, %v287, 0
        %v392 = vsel %vm363, %v288, 0
        %v395 = vsel %vm363, %v289, 0
        %v398 = vsel %vm363, %v290, 0
        %v401 = vsel %vm363, %v263, 0
        %v404 = vsel %vm363, %v264, 0
        %v407 = vsel %vm363, %v265, 0
        %v410 = vsel %vm363, %v266, 0
        %v413 = vsel %vm363, %v267, 0
        %v416 = vsel %vm363, %v268, 0
        %v419 = vsel %vm363, %v269, 0
        %v422 = vsel %vm363, %v270, 0
        %v425 = vsel %vm363, %v271, 0
        %v428 = vsel %vm363, %v272, 0
        %v431 = vsel %vm363, %v273, 0
        %v434 = vsel %vm363, %v274, 0
        %v437 = vsel %vm363, %v275, 0
        %v440 = vsel %vm363, %v276, 0
        %v443 = vsel %vm363, %v277, 0
        %v446 = vsel %vm363, %v278, 0
        %448 = vmatpush.xpose.msra.mxu0 %v446
        %449 = vmatpush.xpose.msra.mxu0 %v443
        %450 = vmatpush.xpose.msra.mxu0 %v440
        %451 = vmatpush.xpose.msra.mxu0 %v437
        %452 = vmatpush.xpose.msra.mxu0 %v434
        %453 = vmatpush.xpose.msra.mxu0 %v431
        %454 = vmatpush.xpose.msra.mxu0 %v428
        %455 = vmatpush.xpose.msra.mxu0 %v425
        %456 = vmatpush.xpose.msra.mxu0 %v422
        %457 = vmatpush.xpose.msra.mxu0 %v419
        %458 = vmatpush.xpose.msra.mxu0 %v416
        %459 = vmatpush.xpose.msra.mxu0 %v413
        %460 = vmatpush.xpose.msra.mxu0 %v410
        %461 = vmatpush.xpose.msra.mxu0 %v407
        %462 = vmatpush.xpose.msra.mxu0 %v404
        %463 = vmatpush.xpose.msra.mxu0 %v401
        %464 = vmatmul.f32.gmra.mxu0 %v365
        %v465 = vpop.f32.mrf.mxu0
        %v466 = vadd.f32 %v306, %v465
        %467 = vmatmul.f32.gmra.mxu0 %v368
        %v468 = vpop.f32.mrf.mxu0
        %v469 = vadd.f32 %v311, %v468
        %470 = vmatmul.f32.gmra.mxu0 %v371
        %v471 = vpop.f32.mrf.mxu0
        %v472 = vadd.f32 %v316, %v471
        %473 = vmatmul.f32.gmra.mxu0 %v374
        %v474 = vpop.f32.mrf.mxu0
        %v475 = vadd.f32 %v321, %v474
        %476 = vmatmul.f32.gmra.mxu0 %v377
        %v477 = vpop.f32.mrf.mxu0
        %v478 = vadd.f32 %v326, %v477
        %479 = vmatmul.f32.gmra.mxu0 %v380
        %v480 = vpop.f32.mrf.mxu0
        %v481 = vadd.f32 %v331, %v480
        %482 = vmatmul.f32.gmra.mxu0 %v383
        %v483 = vpop.f32.mrf.mxu0
        %v484 = vadd.f32 %v336, %v483
        %485 = vmatmul.f32.gmra.mxu0 %v386
        %v486 = vpop.f32.mrf.mxu0
        %v487 = vadd.f32 %v341, %v486
        %488 = vmatmul.f32.gmra.mxu0 %v389
        %v489 = vpop.f32.mrf.mxu0
        %v490 = vadd.f32 %v346, %v489
        %491 = vmatmul.f32.gmra.mxu0 %v392
        %v492 = vpop.f32.mrf.mxu0
        %v493 = vadd.f32 %v351, %v492
        %494 = vmatmul.f32.gmra.mxu0 %v395
        %v495 = vpop.f32.mrf.mxu0
        %v496 = vadd.f32 %v356, %v495
        %497 = vmatmul.f32.gmra.mxu0 %v398
        %v498 = vpop.f32.mrf.mxu0
        %v499 = vadd.f32 %v361, %v498
        %500 = vdwg.mxu0
        %501 = vst [vmem:[%s249] sm:$0xff] %v466
        %502 = vst [vmem:[%s249 + $0x8] sm:$0xff] %v469
        %503 = vst [vmem:[%s249 + $0x10] sm:$0xff] %v472
        %504 = vst [vmem:[%s249 + $0x18] sm:$0xff] %v475
        %505 = vst [vmem:[%s249 + $0x20] sm:$0xff] %v478
        %506 = vst [vmem:[%s249 + $0x28] sm:$0xff] %v481
        %507 = vst [vmem:[%s249 + $0x30] sm:$0xff] %v484
        %508 = vst [vmem:[%s249 + $0x38] sm:$0xff] %v487
        %509 = vst [vmem:[%s249 + $0x40] sm:$0xff] %v490
        %510 = vst [vmem:[%s249 + $0x48] sm:$0xff] %v493
        %511 = vst [vmem:[%s249 + $0x50] sm:$0xff] %v496
        %512 = vst [vmem:[%s249 + $0x58] sm:$0xff] %v499
        %v513 = vld [vmem:[%s3] sm:$0xff]
        %v514 = vld [vmem:[%s3 + $0x8] sm:$0xff]
        %v515 = vld [vmem:[%s3 + $0x10] sm:$0xff]
        %v516 = vld [vmem:[%s3 + $0x18] sm:$0xff]
        %v517 = vld [vmem:[%s4] sm:$0xff]
        %v518 = vld [vmem:[%s4 + $0x8] sm:$0xff]
        %v519 = vld [vmem:[%s4 + $0x10] sm:$0xff]
        %v520 = vld [vmem:[%s4 + $0x18] sm:$0xff]
        %522 = vset.pattern.permute.xlu0 0
        %523 = vperm.xlu0 %522, %v517
        %v524 = vpop.permute.xlu0 %523
        %527 = vset.pattern.permute.xlu0 0
        %528 = vperm.xlu0 %527, %v518
        %v529 = vpop.permute.xlu0 %528
        %532 = vset.pattern.permute.xlu0 0
        %533 = vperm.xlu0 %532, %v519
        %v534 = vpop.permute.xlu0 %533
        %537 = vset.pattern.permute.xlu0 0
        %538 = vperm.xlu0 %537, %v520
        %v539 = vpop.permute.xlu0 %538
        %v542 = vsel %vm363, %v513, 0
        %v545 = vsel %vm363, %v514, 0
        %v548 = vsel %vm363, %v515, 0
        %v551 = vsel %vm363, %v516, 0
        %553 = vmatpush.xpose.msra.mxu0 %v446
        %554 = vmatpush.xpose.msra.mxu0 %v443
        %555 = vmatpush.xpose.msra.mxu0 %v440
        %556 = vmatpush.xpose.msra.mxu0 %v437
        %557 = vmatpush.xpose.msra.mxu0 %v434
        %558 = vmatpush.xpose.msra.mxu0 %v431
        %559 = vmatpush.xpose.msra.mxu0 %v428
        %560 = vmatpush.xpose.msra.mxu0 %v425
        %561 = vmatpush.xpose.msra.mxu0 %v422
        %562 = vmatpush.xpose.msra.mxu0 %v419
        %563 = vmatpush.xpose.msra.mxu0 %v416
        %564 = vmatpush.xpose.msra.mxu0 %v413
        %565 = vmatpush.xpose.msra.mxu0 %v410
        %566 = vmatpush.xpose.msra.mxu0 %v407
        %567 = vmatpush.xpose.msra.mxu0 %v404
        %568 = vmatpush.xpose.msra.mxu0 %v401
        %569 = vmatmul.f32.gmra.mxu0 %v542
        %v570 = vpop.f32.mrf.mxu0
        %v571 = vadd.f32 %v524, %v570
        %572 = vmatmul.f32.gmra.mxu0 %v545
        %v573 = vpop.f32.mrf.mxu0
        %v574 = vadd.f32 %v529, %v573
        %575 = vmatmul.f32.gmra.mxu0 %v548
        %v576 = vpop.f32.mrf.mxu0
        %v577 = vadd.f32 %v534, %v576
        %578 = vmatmul.f32.gmra.mxu0 %v551
        %v579 = vpop.f32.mrf.mxu0
        %v580 = vadd.f32 %v539, %v579
        %581 = vdwg.mxu0
        %582 = vst [vmem:[%s256] sm:$0xff] %v571
        %583 = vst [vmem:[%s256 + $0x8] sm:$0xff] %v574
        %584 = vst [vmem:[%s256 + $0x10] sm:$0xff] %v577
        %585 = vst [vmem:[%s256 + $0x18] sm:$0xff] %v580
        %s586 = sand.u32 %s142, 1
        %s587 = scalar_lea.sflag [#allocation3], %s586
        %s588 = sand.u32 %s142, 1
        %s589 = smul.addr %s588, 96
        %s590 = scalar_lea.vmem [#allocation2], %s589
        %s591 = sand.u32 %s168, 1
        %s592 = scalar_lea.sflag [#allocation5], %s591
        %s593 = sand.u32 %s168, 1
        %s594 = smul.addr %s593, 32
        %s595 = scalar_lea.vmem [#allocation4], %s594
        // Predicated region
        $region41: #{tpu_custom_call.1} parent=39 // pred_check
          %p596 = pneg %p152
        $region42: #{tpu_custom_call.1} parent=39 // pred_check_branch
          %598 = sbr.rel (%p596) target = $region44
        $region43: #{tpu_custom_call.1} parent=39 // pred_region
          %600 = vsyncadd %s587, 0
          %s601 = smul.addr %s24, 8
          %s602 = scalar_lea.hbm %s5, %s601
          %s603 = sshll.u32 %s590, 4
          %s604 = int_to_ptr.vmem [resolvable:$true] %s603
          %s605 = sshll.u32 %s602, 4
          %s606 = int_to_ptr.hbm [resolvable:$true] %s605
          %611 = dma.vmem_to_hbm [thread:$0]  %s604, 1536, %s606, %s587, 128, 256, 8
        $region44: #{tpu_custom_call.1} parent=39 // pred_fallthru
          _
        // Predicated region
        $region45: #{tpu_custom_call.1} parent=39 // pred_check
          %p612 = pneg %p178
        $region46: #{tpu_custom_call.1} parent=39 // pred_check_branch
          %614 = sbr.rel (%p612) target = $region48
        $region47: #{tpu_custom_call.1} parent=39 // pred_region
          %616 = vsyncadd %s592, 0
          %s617 = smul.addr %s24, 8
          %s618 = scalar_lea.hbm %s6, %s617
          %s619 = sshll.u32 %s595, 4
          %s620 = int_to_ptr.vmem [resolvable:$true] %s619
          %s621 = sshll.u32 %s618, 4
          %s622 = int_to_ptr.hbm [resolvable:$true] %s621
          %627 = dma.vmem_to_hbm [thread:$0]  %s620, 512, %s622, %s592, 128, 256, 8
        $region48: #{tpu_custom_call.1} parent=39 // pred_fallthru
          _
      $region40: #{tpu_custom_call.1} parent=5 // pred_fallthru
        _
      %p628 = scmp.le.s32.totalorder 2, %s19
      // Predicated region
      $region49: #{tpu_custom_call.1} parent=5 // pred_check
        %p629 = pneg %p628
      $region50: #{tpu_custom_call.1} parent=5 // pred_check_branch
        %631 = sbr.rel (%p629) target = $region52
      $region51: #{tpu_custom_call.1} parent=5 // pred_region
        %s632 = ssub.s32 %s19, 2
        // Predicated region
        $region53: #{tpu_custom_call.1} parent=51 // pred_check
          %p633 = pneg %p158
        $region54: #{tpu_custom_call.1} parent=51 // pred_check_branch
          %635 = sbr.rel (%p633) target = $region56
        $region55: #{tpu_custom_call.1} parent=51 // pred_region
          %s636 = sand.u32 %s143, 1
          %s637 = scalar_lea.sflag [#allocation3], %s636
          %s638 = sand.u32 %s143, 1
          %s639 = smul.addr %s638, 96
          %s640 = scalar_lea.vmem [#allocation2], %s639
          %642 = dma.done %s637, 1536
        $region56: #{tpu_custom_call.1} parent=51 // pred_fallthru
          _
        // Predicated region
        $region57: #{tpu_custom_call.1} parent=51 // pred_check
          %p643 = pneg %p184
        $region58: #{tpu_custom_call.1} parent=51 // pred_check_branch
          %645 = sbr.rel (%p643) target = $region60
        $region59: #{tpu_custom_call.1} parent=51 // pred_region
          %s646 = sand.u32 %s169, 1
          %s647 = scalar_lea.sflag [#allocation5], %s646
          %s648 = sand.u32 %s169, 1
          %s649 = smul.addr %s648, 32
          %s650 = scalar_lea.vmem [#allocation4], %s649
          %652 = dma.done %s647, 512
        $region60: #{tpu_custom_call.1} parent=51 // pred_fallthru
          _
      $region52: #{tpu_custom_call.1} parent=5 // pred_fallthru
        _
    $region6: #{tpu_custom_call.1} parent=1 // loop_footer
      %s23 = sadd.s32 1, %s19
    $region7: #{tpu_custom_call.1} parent=1 // loop_footer_branch
      %18 = sbr.rel target = $region3
    $region8: #{tpu_custom_call.1} parent=1 // loop_exit
      _
    %653 = vsyncpa [#allocation3], 1
    %s654 = scalar_lea.sflag [#allocation3], 1
    %655 = vsyncpa %s654, 1
    %656 = vsyncpa [#allocation5], 1
    %s657 = scalar_lea.sflag [#allocation5], 1
    %658 = vsyncpa %s657, 1

</llo_original>
